<compile_context>
chip_gen: v7x
topology: tpu7x:2x2x1
jax: 0.10.0
libtpu: 0.0.40
codegen_flags: <defaults>
</compile_context>

<pallas_src>
import jax
import jax.numpy as jnp
from jax.experimental import pallas as pl
from jax.experimental.pallas import tpu as pltpu


def _round_up(x, m):
    return (x + m - 1) // m * m


def _conv1x1_kernel(x_ref, w_ref, b_ref, o_ref):
    # x_ref: (C_in, TN)          -- streamed spatial tile (lane axis = spatial)
    # w_ref: (C_out_pad, C_in)   -- resident full-array VMEM operand
    # b_ref: (C_out_pad, 1)      -- resident full-array VMEM operand
    # o_ref: (C_out, TN)         -- lane-dense store (only the real channels)
    c_out = o_ref.shape[0]
    acc = jnp.dot(w_ref[...], x_ref[...], preferred_element_type=jnp.float32)
    acc = acc + b_ref[...]
    o_ref[...] = acc[:c_out, :].astype(o_ref.dtype)


def conv1x1_nchw(x, weight, bias, *, tn=1024, input_buffers=2):
    """1x1 Conv2d, equivalent to torch.nn.Conv2d(C_in, C_out, kernel_size=1).

    x:      (N, C_in, H, W)   -- consumed in its HBM dtype (f32 or bf16);
                                 no wrapper-side cast (would be an extra HBM pass).
    weight: (C_out, C_in, 1, 1)
    bias:   (C_out,)
    returns (N, C_out, H, W) in x.dtype

    Layout: NCHW is kept as-is; the spatial dims become the matmul's lane axis,
    so no HBM transposes, pads, or slices are needed on input or output.
    """
    N, C_in, H, W = x.shape
    C_out = weight.shape[0]
    S = H * W

    in_dtype = x.dtype
    out_dtype = x.dtype
    in_size = jnp.dtype(in_dtype).itemsize
    out_size = jnp.dtype(out_dtype).itemsize

    # Spatial tile: multiple of 128 (lane-dense, unmasked vst for full tiles),
    # capped at 2048 so the double-buffered f32 input tile (2 x 512*2048*4B =
    # 8 MiB) stays comfortably inside every generation's scoped VMEM.
    tn = max(128, min(int(tn), 2048))
    tn = _round_up(tn, 128)
    tn = min(tn, _round_up(S, 128))          # don't over-pad tiny feature maps
    # Keep >= 4 total grid steps when possible so v7x's two TensorCores
    # (grid axes are "parallel") both get work even for N=1.
    while tn > 128 and N * (-(-S // tn)) < 4:
        tn = max(128, _round_up(tn // 2, 128))

    C_out_pad = _round_up(C_out, 8)          # sublane multiple (v5e-friendly)

    x3 = x.reshape(N, C_in, S)               # view only: no pad, no cast
    w2d = weight.reshape(C_out, C_in).astype(in_dtype)
    b1d = bias.astype(jnp.float32)
    if C_out_pad != C_out:
        w2d = jnp.pad(w2d, ((0, C_out_pad - C_out), (0, 0)))
        b1d = jnp.pad(b1d, (0, C_out_pad - C_out))
    b2d = b1d.reshape(C_out_pad, 1)

    grid = (N, pl.cdiv(S, tn))

    # Explicit scoped-VMEM budget: streamed input buffers + output buffers
    # + resident weight/bias + slack.  Keeps v5e (16 MiB default) and v7x
    # (64 MiB physical) both happy for any allowed tn.
    bufs = max(2, int(input_buffers))
    vmem_needed = (bufs * C_in * tn * in_size
                   + 2 * C_out_pad * tn * out_size
                   + C_out_pad * _round_up(C_in, 128) * in_size
                   + C_out_pad * 128 * 4
                   + (2 << 20))
    vmem_limit = int(min(max(vmem_needed, 4 << 20), 48 << 20))

    cost = pl.CostEstimate(
        flops=2 * N * S * C_in * C_out_pad,
        transcendentals=0,
        bytes_accessed=(N * C_in * S + C_out_pad * C_in) * in_size
        + C_out_pad * 4
        + N * C_out * S * out_size,
    )

    x_spec_kwargs = {}
    if bufs != 2:
        # Only worth trying if a trace shows exposed DMA at step starts.
        x_spec_kwargs["pipeline_mode"] = pl.Buffered(bufs)

    out3 = pl.pallas_call(
        _conv1x1_kernel,
        out_shape=jax.ShapeDtypeStruct((N, C_out, S), out_dtype),
        grid_spec=pltpu.PrefetchScalarGridSpec(
            num_scalar_prefetch=0,
            grid=grid,
            in_specs=[
                pl.BlockSpec((None, C_in, tn), lambda n, j: (n, 0, j),
                             **x_spec_kwargs),
                # Tiny resident operands: whole array in VMEM, fetched once.
                pl.BlockSpec(memory_space=pltpu.MemorySpace.VMEM),
                pl.BlockSpec(memory_space=pltpu.MemorySpace.VMEM),
            ],
            out_specs=pl.BlockSpec((None, C_out, tn), lambda n, j: (n, 0, j)),
        ),
        compiler_params=pltpu.CompilerParams(
            dimension_semantics=("parallel", "parallel"),
            vmem_limit_bytes=vmem_limit),
        cost_estimate=cost,
    )(x3, w2d, b2d)

    return out3.reshape(N, C_out, H, W)


class PVRCNNPallas:
    """Pallas stand-in for PV_RCNN: holds the classifier Conv2d(512, C_out, 1)."""

    def __init__(self, in_channels, out_channels, key):
        del in_channels  # classifier input channel count is fixed to 512 in the module
        c_in = 512
        k_w, k_b = jax.random.split(key)
        bound = 1.0 / jnp.sqrt(jnp.float32(c_in))
        self.weight = jax.random.uniform(
            k_w, (out_channels, c_in, 1, 1), jnp.float32, -bound, bound)
        self.bias = jax.random.uniform(
            k_b, (out_channels,), jnp.float32, -bound, bound)

    def classifier(self, x, *, tn=1024, input_buffers=2):
        return conv1x1_nchw(x, self.weight, self.bias,
                            tn=tn, input_buffers=input_buffers)

    def forward(self, data):
        # Faithful to the reference: forward() body is `pass` -> returns None.
        # TODO(synk): full PV-RCNN backbone (build_network from YAML cfg) not representable here.
        return None


def _ref_conv1x1(x, w, b):
    c_out = w.shape[0]
    return (jnp.einsum("nchw,oc->nohw", x.astype(jnp.float32),
                       w.reshape(c_out, -1),
                       precision="highest",
                       preferred_element_type=jnp.float32)
            + b.reshape(1, c_out, 1, 1))


if __name__ == "__main__":
    key = jax.random.PRNGKey(0)
    k_model, k_x, k_x2 = jax.random.split(key, 3)

    out_channels = 4
    model = PVRCNNPallas(in_channels=4, out_channels=out_channels, key=k_model)

    # BEV-ish feature map with the module-mandated 512 input channels.
    N, C_in, H, W = 2, 512, 16, 16
    x = jax.random.normal(k_x, (N, C_in, H, W), jnp.float32)
    ref = _ref_conv1x1(x, model.weight, model.bias)

    # f32 path (exercises the min-grid-steps tile clamp: grid=(2,2), tn=128).
    y = jax.block_until_ready(model.classifier(x))
    assert y.shape == (N, out_channels, H, W), y.shape
    assert jnp.allclose(y, ref, atol=1e-3, rtol=1e-3), \
        float(jnp.max(jnp.abs(y - ref)))

    # Input already bf16 in HBM (the only case where bf16 helps a single-pass
    # mem-bound kernel): no wrapper cast, kernel consumes bf16 directly.
    x_bf = x.astype(jnp.bfloat16)
    y_bf = jax.block_until_ready(model.classifier(x_bf))
    assert y_bf.shape == (N, out_channels, H, W)
    assert jnp.allclose(y_bf.astype(jnp.float32), ref, atol=5e-2, rtol=5e-2)

    # Odd spatial size / odd C_out: exercises the Pallas-masked partial block
    # (no wrapper pad/slice) and the C_out < 8 store path.
    model3 = PVRCNNPallas(in_channels=4, out_channels=3, key=k_model)
    x2 = jax.random.normal(k_x2, (1, 512, 9, 9), jnp.float32)
    y2 = jax.block_until_ready(model3.classifier(x2))
    assert y2.shape == (1, 3, 9, 9), y2.shape
    ref2 = _ref_conv1x1(x2, model3.weight, model3.bias)
    assert jnp.allclose(y2, ref2, atol=1e-3, rtol=1e-3), \
        float(jnp.max(jnp.abs(y2 - ref2)))

    # forward() itself is a no-op per the reference implementation.
    assert model.forward({"points": x}) is None

    print("KERNEL_OK")
</pallas_src>

<mosaic_0001>
module attributes {stable_mosaic.version = 11 : i64} {
  func.func @_conv1x1_kernel(%arg0: i32, %arg1: i32, %arg2: memref<1x512x128xf32, #tpu.memory_space<vmem>>, %arg3: memref<8x512xf32, #tpu.memory_space<vmem>>, %arg4: memref<8x1xf32, #tpu.memory_space<vmem>>, %arg5: memref<1x4x128xf32, #tpu.memory_space<vmem>>) attributes {dimension_semantics = [#tpu.dimension_semantics<parallel>, #tpu.dimension_semantics<parallel>], iteration_bounds = array<i64: 2, 2>, scalar_prefetch = 0 : i64, scratch_operands = 0 : i64, tpu.core_type = #tpu.core_type<tc>, window_params = [{transform_indices = @transform_0, window_bounds = array<i64: 1, 512, 128>}, {pipeline_mode = #tpu.pipeline_mode<synchronous>, transform_indices = @transform_1, window_bounds = array<i64: 8, 512>}, {pipeline_mode = #tpu.pipeline_mode<synchronous>, transform_indices = @transform_2, window_bounds = array<i64: 8, 1>}, {transform_indices = @transform_3, window_bounds = array<i64: 1, 4, 128>}]} {
    %c0 = arith.constant 0 : index
    %c0_0 = arith.constant 0 : index
    %0 = vector.load %arg3[%c0, %c0_0] : memref<8x512xf32, #tpu.memory_space<vmem>>, vector<8x512xf32>
    %c0_1 = arith.constant 0 : index
    %c0_2 = arith.constant 0 : index
    %c0_3 = arith.constant 0 : index
    %1 = vector.load %arg2[%c0_1, %c0_2, %c0_3] : memref<1x512x128xf32, #tpu.memory_space<vmem>>, vector<1x512x128xf32>
    %2 = vector.shape_cast %1 : vector<1x512x128xf32> to vector<512x128xf32>
    %cst = arith.constant dense<0.000000e+00> : vector<8x128xf32>
    %3 = tpu.matmul %0, %2, %cst {dimension_numbers = #tpu.dot_dimension_numbers<[1], [0], [0], [1], [0, 0, 1, 1], [], []>} : vector<8x512xf32>, vector<512x128xf32>, vector<8x128xf32> -> vector<8x128xf32>
    %c0_4 = arith.constant 0 : index
    %c0_5 = arith.constant 0 : index
    %4 = vector.load %arg4[%c0_4, %c0_5] : memref<8x1xf32, #tpu.memory_space<vmem>>, vector<8x1xf32>
    %5 = vector.broadcast %4 : vector<8x1xf32> to vector<8x128xf32>
    %6 = arith.addf %3, %5 : vector<8x128xf32>
    %7 = vector.extract_strided_slice %6 {offsets = [0, 0], sizes = [4, 128], strides = [1, 1]} : vector<8x128xf32> to vector<4x128xf32>
    %c0_6 = arith.constant 0 : index
    %c0_7 = arith.constant 0 : index
    %c0_8 = arith.constant 0 : index
    %8 = vector.load %arg5[%c0_6, %c0_7, %c0_8] : memref<1x4x128xf32, #tpu.memory_space<vmem>>, vector<1x4x128xf32>
    %9 = vector.shape_cast %8 : vector<1x4x128xf32> to vector<4x128xf32>
    %10 = vector.shape_cast %7 : vector<4x128xf32> to vector<1x4x128xf32>
    tpu.vector_store %arg5[%c0_6, %c0_7, %c0_8], %10 {strides = array<i32>} : memref<1x4x128xf32, #tpu.memory_space<vmem>>, vector<1x4x128xf32>,
    return
  }
  func.func @transform_0(%arg0: i32, %arg1: i32) -> (i32, i32, i32) {
    %c0_i32 = arith.constant 0 : i32
    %c0_i32_0 = arith.constant 0 : i32
    return %arg0, %c0_i32, %arg1 : i32, i32, i32
  }
  func.func @transform_1(%arg0: i32, %arg1: i32) -> (i32, i32) {
    %c0_i32 = arith.constant 0 : i32
    %c0_i32_0 = arith.constant 0 : i32
    %c0_i32_1 = arith.constant 0 : i32
    return %c0_i32, %c0_i32_0 : i32, i32
  }
  func.func @transform_2(%arg0: i32, %arg1: i32) -> (i32, i32) {
    %c0_i32 = arith.constant 0 : i32
    %c0_i32_0 = arith.constant 0 : i32
    %c0_i32_1 = arith.constant 0 : i32
    return %c0_i32, %c0_i32_0 : i32, i32
  }
  func.func @transform_3(%arg0: i32, %arg1: i32) -> (i32, i32, i32) {
    %c0_i32 = arith.constant 0 : i32
    %c0_i32_0 = arith.constant 0 : i32
    return %arg0, %c0_i32, %arg1 : i32, i32, i32
  }
}

</mosaic_0001>

<llo_original>
// kernel: tpu_custom_call.1
$region0: #{tpu_custom_call.1}
  #allocation0 [shape = 'u32[]', space=smem, size = 0x4, offset = 0x4, fixed_abs, tag = 'smem constant byte address 0x4 - core index']
  #allocation1 [shape = 'u32[144,128]{1,0:T(1,128)}', space=vmem, size = 0x12000, scoped, tag = 'internal scratch']
  %s0 = inlined_call_operand.hbm [shape: f32[2,512,256], index: 0, kind: input, shape index: {}]
  %s1 = inlined_call_operand.hbm [shape: f32[8,512], index: 1, kind: input, shape index: {}]
  %s2 = inlined_call_operand.vmem [shape: f32[8,1], index: 2, kind: input, shape index: {}]
  %s3 = inlined_call_operand.hbm [shape: f32[2,4,256], index: 3, kind: output, shape index: {}]
  %s4 = sld [smem:[#allocation0]]
  $region53: #{tpu_custom_call.1} parent=0
    _
  %s6 = ssub.s32 1, %s4
  %s7 = scalar_select 0, %s6, %s4
  $region1: #{tpu_custom_call.1} parent=0
    #allocation2 [shape = 'u8[524288]{0}', space=vmem, size = 0x80000, scoped, tag = 'input window, operand 0']
    #allocation3 [shape = 's32[2]{0}', space=sflag, size = 0x8, scoped, tag = 'scoped memory for tpu_custom_call.1']
    #allocation4 [shape = 's32[2]{0}', space=sflag, size = 0x8, scoped, tag = 'scoped memory for tpu_custom_call.1']
    #allocation5 [shape = 'u8[16384]{0}', space=vmem, size = 0x4000, scoped, tag = 'input window, operand 1, single buffered']
    #allocation6 [shape = 's32[1]{0}', space=sflag, size = 0x4, scoped, tag = 'scoped memory for tpu_custom_call.1']
    #allocation7 [shape = 'u8[4096]{0}', space=vmem, size = 0x1000, scoped, tag = 'output window, operand 0']
    %8 = vsyncpa [#allocation3], 0
    %s9 = scalar_lea.sflag [#allocation3], 1
    %10 = vsyncpa %s9, 0
    %11 = vsyncpa [#allocation6], 0
    %12 = vsyncpa [#allocation4], 0
    %s13 = scalar_lea.sflag [#allocation4], 1
    %14 = vsyncpa %s13, 0
    loop: start=0, step=1, limit=6
    $region2: #{tpu_custom_call.1} parent=1 // loop_pre_header
      _
    $region3: #{tpu_custom_call.1} parent=1 // loop_header
      %s16 = sphi 0, %s20
      %p17 = scmp.ge.s32.totalorder %s16, 6
      %s23 = sphi 0, %s35
      %s24 = sphi 0, %s31
      %s25 = sphi 0, %s23
      %s26 = sphi 0, %s24
      %s27 = sphi 0, %s25
      %s28 = sphi 0, %s26
      %s40 = sphi 0, %s42
      %s43 = sphi 0, %s40
      %s44 = sphi 0, %s43
      %s60 = sphi 0, %s44
      %s64 = sphi 0, %s64
      %s66 = sphi 0, %s64
      %s67 = sphi 0, %s66
      %s81 = sphi 0, %s67
      %s85 = sphi 0, %s85
      %s87 = sphi 0, %s85
      %s88 = sphi 0, %s87
      %s102 = sphi 0, %s88
      %s110 = sphi 0, %s112
      %s113 = sphi 0, %s110
      %s114 = sphi 0, %s113
      %s130 = sphi 0, %s114
    $region4: #{tpu_custom_call.1} parent=1 // loop_header_branch
      %19 = sbr.rel (%p17) target = $region8
    $region5: #{tpu_custom_call.1} parent=1 // loop_body
      %s21 = ssub.s32 %s16, 1
      %s22 = ssub.s32 %s16, 2
      %s29 = sadd.s32 1, %s24
      %p30 = scmp.ge.s32.totalorder %s29, 2
      %s31 = scalar_select %p30, 0, %s29
      %s32 = sadd.s32 1, %s23
      %s33 = scalar_select %p30, %s32, %s23
      %p34 = scmp.ge.s32.totalorder %s33, 2
      %s35 = scalar_select %p34, 0, %s33
      %s36 = ssub.s32 %s23, %s35
      %s37 = ssub.s32 %s24, %s31
      %s38 = sor.u32 %s36, %s37
      %p39 = scmp.eq.s32.totalorder %s38, 0
      %s41 = sadd.s32 %s40, 1
      %s42 = scalar_select %p39, %s40, %s41
      %p45 = pneg %p39
      %p46 = scmp.eq.s32.totalorder %s16, 3
      %p47 = por %p45, %p46
      %p48 = scmp.ne.s32.totalorder %s40, %s43
      %p49 = scmp.eq.s32.totalorder %s16, 0
      %p50 = por %p48, %p49
      %p51 = scmp.ne.s32.totalorder %s40, %s43
      %p52 = scmp.eq.s32.totalorder %s21, 3
      %p53 = por %p51, %p52
      %p54 = scmp.ne.s32.totalorder %s43, %s44
      %p55 = scmp.eq.s32.totalorder %s21, 0
      %p56 = por %p54, %p55
      %p57 = scmp.ne.s32.totalorder %s43, %s44
      %p58 = scmp.eq.s32.totalorder %s22, 3
      %p59 = por %p57, %p58
      %p61 = scmp.ne.s32.totalorder %s44, %s60
      %p62 = scmp.eq.s32.totalorder %s22, 0
      %p63 = por %p61, %p62
      %s65 = sadd.s32 %s64, 1
      %p68 = scmp.eq.s32.totalorder %s16, 3
      %p69 = scmp.ne.s32.totalorder %s64, %s66
      %p70 = scmp.eq.s32.totalorder %s16, 0
      %p71 = por %p69, %p70
      %p72 = scmp.ne.s32.totalorder %s64, %s66
      %p73 = scmp.eq.s32.totalorder %s21, 3
      %p74 = por %p72, %p73
      %p75 = scmp.ne.s32.totalorder %s66, %s67
      %p76 = scmp.eq.s32.totalorder %s21, 0
      %p77 = por %p75, %p76
      %p78 = scmp.ne.s32.totalorder %s66, %s67
      %p79 = scmp.eq.s32.totalorder %s22, 3
      %p80 = por %p78, %p79
      %p82 = scmp.ne.s32.totalorder %s67, %s81
      %p83 = scmp.eq.s32.totalorder %s22, 0
      %p84 = por %p82, %p83
      %s86 = sadd.s32 %s85, 1
      %p89 = scmp.eq.s32.totalorder %s16, 3
      %p90 = scmp.ne.s32.totalorder %s85, %s87
      %p91 = scmp.eq.s32.totalorder %s16, 0
      %p92 = por %p90, %p91
      %p93 = scmp.ne.s32.totalorder %s85, %s87
      %p94 = scmp.eq.s32.totalorder %s21, 3
      %p95 = por %p93, %p94
      %p96 = scmp.ne.s32.totalorder %s87, %s88
      %p97 = scmp.eq.s32.totalorder %s21, 0
      %p98 = por %p96, %p97
      %p99 = scmp.ne.s32.totalorder %s87, %s88
      %p100 = scmp.eq.s32.totalorder %s22, 3
      %p101 = por %p99, %p100
      %p103 = scmp.ne.s32.totalorder %s88, %s102
      %p104 = scmp.eq.s32.totalorder %s22, 0
      %p105 = por %p103, %p104
      %s106 = ssub.s32 %s23, %s35
      %s107 = ssub.s32 %s24, %s31
      %s108 = sor.u32 %s106, %s107
      %p109 = scmp.eq.s32.totalorder %s108, 0
      %s111 = sadd.s32 %s110, 1
      %s112 = scalar_select %p109, %s110, %s111
      %p115 = pneg %p109
      %p116 = scmp.eq.s32.totalorder %s16, 3
      %p117 = por %p115, %p116
      %p118 = scmp.ne.s32.totalorder %s110, %s113
      %p119 = scmp.eq.s32.totalorder %s16, 0
      %p120 = por %p118, %p119
      %p121 = scmp.ne.s32.totalorder %s110, %s113
      %p122 = scmp.eq.s32.totalorder %s21, 3
      %p123 = por %p121, %p122
      %p124 = scmp.ne.s32.totalorder %s113, %s114
      %p125 = scmp.eq.s32.totalorder %s21, 0
      %p126 = por %p124, %p125
      %p127 = scmp.ne.s32.totalorder %s113, %s114
      %p128 = scmp.eq.s32.totalorder %s22, 3
      %p129 = por %p127, %p128
      %p131 = scmp.ne.s32.totalorder %s114, %s130
      %p132 = scmp.eq.s32.totalorder %s22, 0
      %p133 = por %p131, %p132
      %p134 = scmp.le.s32.totalorder 1, %s16
      %p135 = scmp.lt.s32.totalorder %s16, 5
      %p136 = pnand %p134, %p135
      %p137 = pneg %p136
      // Predicated region
      $region9: #{tpu_custom_call.1} parent=5 // pred_check
        _
      $region10: #{tpu_custom_call.1} parent=5 // pred_check_branch
        %139 = sbr.rel (%p136) target = $region12
      $region11: #{tpu_custom_call.1} parent=5 // pred_region
        %s140 = ssub.s32 %s16, 1
        // Predicated region
        $region13: #{tpu_custom_call.1} parent=11 // pred_check
          %p141 = pneg %p77
        $region14: #{tpu_custom_call.1} parent=11 // pred_check_branch
          %143 = sbr.rel (%p141) target = $region16
        $region15: #{tpu_custom_call.1} parent=11 // pred_region
          %s145 = ssub.s32 512, 512
          %146 = vsyncadd [#allocation6], %s145
          %s148 = sshll.u32 [#allocation5], 4
          %s149 = int_to_ptr.vmem [resolvable:$true] %s148
          %151 = dma.hbm_to_vmem [thread:$0]  %s1, 512, %s149, [#allocation6]
        $region16: #{tpu_custom_call.1} parent=11 // pred_fallthru
          _
        // Predicated region
        $region17: #{tpu_custom_call.1} parent=11 // pred_check
          %p152 = pneg %p98
        $region18: #{tpu_custom_call.1} parent=11 // pred_check_branch
          %154 = sbr.rel (%p152) target = $region20
        $region19: #{tpu_custom_call.1} parent=11 // pred_region
          _
        $region20: #{tpu_custom_call.1} parent=11 // pred_fallthru
          _
      $region12: #{tpu_custom_call.1} parent=5 // pred_fallthru
        _
      %p155 = scmp.lt.s32.totalorder %s16, 4
      // Predicated region
      $region21: #{tpu_custom_call.1} parent=5 // pred_check
        %p156 = pneg %p155
      $region22: #{tpu_custom_call.1} parent=5 // pred_check_branch
        %158 = sbr.rel (%p156) target = $region24
      $region23: #{tpu_custom_call.1} parent=5 // pred_region
        // Predicated region
        $region25: #{tpu_custom_call.1} parent=23 // pred_check
          %p159 = pneg %p50
        $region26: #{tpu_custom_call.1} parent=23 // pred_check_branch
          %161 = sbr.rel (%p159) target = $region28
        $region27: #{tpu_custom_call.1} parent=23 // pred_region
          %s162 = sand.u32 %s40, 1
          %s163 = scalar_lea.sflag [#allocation3], %s162
          %s164 = sand.u32 %s40, 1
          %s165 = smul.addr %s164, 512
          %s166 = scalar_lea.vmem [#allocation2], %s165
          %s168 = ssub.s32 8192, 8192
          %169 = vsyncadd %s163, %s168
          %s170 = smul.addr %s23, 128
          %s171 = sadd.s32 %s24, %s170
          %s172 = smul.addr %s171, 128
          %s173 = scalar_lea.hbm %s0, %s172
          %s174 = sshll.u32 %s166, 4
          %s175 = int_to_ptr.vmem [resolvable:$true] %s174
          %180 = dma.hbm_to_vmem [thread:$0]  %s173, 8192, %s175, %s163, 256, 128, 8
        $region28: #{tpu_custom_call.1} parent=23 // pred_fallthru
          _
      $region24: #{tpu_custom_call.1} parent=5 // pred_fallthru
        _
      %p181 = scmp.le.s32.totalorder 1, %s16
      %p182 = scmp.lt.s32.totalorder %s16, 5
      %p183 = pnand %p181, %p182
      %p184 = pneg %p183
      // Predicated region
      $region29: #{tpu_custom_call.1} parent=5 // pred_check
        _
      $region30: #{tpu_custom_call.1} parent=5 // pred_check_branch
        %186 = sbr.rel (%p183) target = $region32
      $region31: #{tpu_custom_call.1} parent=5 // pred_region
        %s187 = ssub.s32 %s16, 1
        %s188 = sand.u32 %s43, 1
        %s189 = scalar_lea.sflag [#allocation3], %s188
        %s190 = sand.u32 %s43, 1
        %s191 = smul.addr %s190, 512
        %s192 = scalar_lea.vmem [#allocation2], %s191
        // Predicated region
        $region33: #{tpu_custom_call.1} parent=31 // pred_check
          %p193 = pneg %p56
        $region34: #{tpu_custom_call.1} parent=31 // pred_check_branch
          %195 = sbr.rel (%p193) target = $region36
        $region35: #{tpu_custom_call.1} parent=31 // pred_region
          %196 = dma.done %s189, 8192
        $region36: #{tpu_custom_call.1} parent=31 // pred_fallthru
          _
        // Predicated region
        $region37: #{tpu_custom_call.1} parent=31 // pred_check
          %p197 = pneg %p77
        $region38: #{tpu_custom_call.1} parent=31 // pred_check_branch
          %199 = sbr.rel (%p197) target = $region40
        $region39: #{tpu_custom_call.1} parent=31 // pred_region
          %200 = dma.done [#allocation6], 512
        $region40: #{tpu_custom_call.1} parent=31 // pred_fallthru
          _
        %s201 = sand.u32 %s43, 1
        %s202 = scalar_lea.sflag [#allocation3], %s201
        %s203 = sand.u32 %s43, 1
        %s204 = smul.addr %s203, 512
        %s205 = scalar_lea.vmem [#allocation2], %s204
        %p206 = pneg %p56
        %p207 = pneg %p53
        %p208 = pneg %p77
        %p209 = pneg %p74
        %p210 = pneg %p98
        %p211 = pneg %p95
        %p212 = pneg %p126
        %p213 = pneg %p123
        %s214 = sand.u32 %s113, 1
        %s215 = scalar_lea.sflag [#allocation4], %s214
        %s216 = sand.u32 %s113, 1
        %s217 = smul.addr %s216, 4
        %s218 = scalar_lea.vmem [#allocation7], %s217
        %v219 = vld [vmem:[#allocation5] sm:$0xff]
        %v220 = vld [vmem:[#allocation5 + $0x8] sm:$0xff]
        %v221 = vld [vmem:[#allocation5 + $0x10] sm:$0xff]
        %v222 = vld [vmem:[#allocation5 + $0x18] sm:$0xff]
        %v223 = vld [vmem:[%s192] sm:$0xff]
        %v224 = vld [vmem:[%s192 + $0x8] sm:$0xff]
        %v225 = vld [vmem:[%s192 + $0x10] sm:$0xff]
        %v226 = vld [vmem:[%s192 + $0x18] sm:$0xff]
        %v227 = vld [vmem:[%s192 + $0x20] sm:$0xff]
        %v228 = vld [vmem:[%s192 + $0x28] sm:$0xff]
        %v229 = vld [vmem:[%s192 + $0x30] sm:$0xff]
        %v230 = vld [vmem:[%s192 + $0x38] sm:$0xff]
        %v231 = vld [vmem:[%s192 + $0x40] sm:$0xff]
        %v232 = vld [vmem:[%s192 + $0x48] sm:$0xff]
        %v233 = vld [vmem:[%s192 + $0x50] sm:$0xff]
        %v234 = vld [vmem:[%s192 + $0x58] sm:$0xff]
        %v235 = vld [vmem:[%s192 + $0x60] sm:$0xff]
        %v236 = vld [vmem:[%s192 + $0x68] sm:$0xff]
        %v237 = vld [vmem:[%s192 + $0x70] sm:$0xff]
        %v238 = vld [vmem:[%s192 + $0x78] sm:$0xff]
        %v239 = vld [vmem:[%s192 + $0x80] sm:$0xff]
        %v240 = vld [vmem:[%s192 + $0x88] sm:$0xff]
        %v241 = vld [vmem:[%s192 + $0x90] sm:$0xff]
        %v242 = vld [vmem:[%s192 + $0x98] sm:$0xff]
        %v243 = vld [vmem:[%s192 + $0xa0] sm:$0xff]
        %v244 = vld [vmem:[%s192 + $0xa8] sm:$0xff]
        %v245 = vld [vmem:[%s192 + $0xb0] sm:$0xff]
        %v246 = vld [vmem:[%s192 + $0xb8] sm:$0xff]
        %v247 = vld [vmem:[%s192 + $0xc0] sm:$0xff]
        %v248 = vld [vmem:[%s192 + $0xc8] sm:$0xff]
        %v249 = vld [vmem:[%s192 + $0xd0] sm:$0xff]
        %v250 = vld [vmem:[%s192 + $0xd8] sm:$0xff]
        %v251 = vld [vmem:[%s192 + $0xe0] sm:$0xff]
        %v252 = vld [vmem:[%s192 + $0xe8] sm:$0xff]
        %v253 = vld [vmem:[%s192 + $0xf0] sm:$0xff]
        %v254 = vld [vmem:[%s192 + $0xf8] sm:$0xff]
        %v255 = vld [vmem:[%s192 + $0x100] sm:$0xff]
        %v256 = vld [vmem:[%s192 + $0x108] sm:$0xff]
        %v257 = vld [vmem:[%s192 + $0x110] sm:$0xff]
        %v258 = vld [vmem:[%s192 + $0x118] sm:$0xff]
        %v259 = vld [vmem:[%s192 + $0x120] sm:$0xff]
        %v260 = vld [vmem:[%s192 + $0x128] sm:$0xff]
        %v261 = vld [vmem:[%s192 + $0x130] sm:$0xff]
        %v262 = vld [vmem:[%s192 + $0x138] sm:$0xff]
        %v263 = vld [vmem:[%s192 + $0x140] sm:$0xff]
        %v264 = vld [vmem:[%s192 + $0x148] sm:$0xff]
        %v265 = vld [vmem:[%s192 + $0x150] sm:$0xff]
        %v266 = vld [vmem:[%s192 + $0x158] sm:$0xff]
        %v267 = vld [vmem:[%s192 + $0x160] sm:$0xff]
        %v268 = vld [vmem:[%s192 + $0x168] sm:$0xff]
        %v269 = vld [vmem:[%s192 + $0x170] sm:$0xff]
        %v270 = vld [vmem:[%s192 + $0x178] sm:$0xff]
        %v271 = vld [vmem:[%s192 + $0x180] sm:$0xff]
        %v272 = vld [vmem:[%s192 + $0x188] sm:$0xff]
        %v273 = vld [vmem:[%s192 + $0x190] sm:$0xff]
        %v274 = vld [vmem:[%s192 + $0x198] sm:$0xff]
        %v275 = vld [vmem:[%s192 + $0x1a0] sm:$0xff]
        %v276 = vld [vmem:[%s192 + $0x1a8] sm:$0xff]
        %v277 = vld [vmem:[%s192 + $0x1b0] sm:$0xff]
        %v278 = vld [vmem:[%s192 + $0x1b8] sm:$0xff]
        %v279 = vld [vmem:[%s192 + $0x1c0] sm:$0xff]
        %v280 = vld [vmem:[%s192 + $0x1c8] sm:$0xff]
        %v281 = vld [vmem:[%s192 + $0x1d0] sm:$0xff]
        %v282 = vld [vmem:[%s192 + $0x1d8] sm:$0xff]
        %v283 = vld [vmem:[%s192 + $0x1e0] sm:$0xff]
        %v284 = vld [vmem:[%s192 + $0x1e8] sm:$0xff]
        %v285 = vld [vmem:[%s192 + $0x1f0] sm:$0xff]
        %v286 = vld [vmem:[%s192 + $0x1f8] sm:$0xff]
        %v287 = vld [vmem:[%s2] sm:$0xff]
        %289 = vset.pattern.permute.xlu0 0
        %290 = vperm.xlu0 %289, %v287
        %v291 = vpop.permute.xlu0 %290
        %293 = vmatprep.subr.mxu0 0.0
        %294 = vmatpush1.msra.mxu0 %v223
        %295 = vmatprep.subr.mxu0 0.0
        %296 = vmatpush1.msra.mxu0 %v224
        %297 = vmatprep.subr.mxu0 0.0
        %298 = vmatpush1.msra.mxu0 %v225
        %299 = vmatprep.subr.mxu0 0.0
        %300 = vmatpush1.msra.mxu0 %v226
        %301 = vmatprep.subr.mxu0 0.0
        %302 = vmatpush1.msra.mxu0 %v227
        %303 = vmatprep.subr.mxu0 0.0
        %304 = vmatpush1.msra.mxu0 %v228
        %305 = vmatprep.subr.mxu0 0.0
        %306 = vmatpush1.msra.mxu0 %v229
        %307 = vmatprep.subr.mxu0 0.0
        %308 = vmatpush1.msra.mxu0 %v230
        %309 = vmatprep.subr.mxu0 0.0
        %310 = vmatpush1.msra.mxu0 %v231
        %311 = vmatprep.subr.mxu0 0.0
        %312 = vmatpush1.msra.mxu0 %v232
        %313 = vmatprep.subr.mxu0 0.0
        %314 = vmatpush1.msra.mxu0 %v233
        %315 = vmatprep.subr.mxu0 0.0
        %316 = vmatpush1.msra.mxu0 %v234
        %317 = vmatprep.subr.mxu0 0.0
        %318 = vmatpush1.msra.mxu0 %v235
        %319 = vmatprep.subr.mxu0 0.0
        %320 = vmatpush1.msra.mxu0 %v236
        %321 = vmatprep.subr.mxu0 0.0
        %322 = vmatpush1.msra.mxu0 %v237
        %323 = vmatprep.subr.mxu0 0.0
        %324 = vmatpush1.msra.mxu0 %v238
        %325 = vmatprep.subr.mxu0 0.0
        %326 = vmatpush1.msra.mxu0 %v239
        %327 = vmatprep.subr.mxu0 0.0
        %328 = vmatpush1.msra.mxu0 %v240
        %329 = vmatprep.subr.mxu0 0.0
        %330 = vmatpush1.msra.mxu0 %v241
        %331 = vmatprep.subr.mxu0 0.0
        %332 = vmatpush1.msra.mxu0 %v242
        %333 = vmatprep.subr.mxu0 0.0
        %334 = vmatpush1.msra.mxu0 %v243
        %335 = vmatprep.subr.mxu0 0.0
        %336 = vmatpush1.msra.mxu0 %v244
        %337 = vmatprep.subr.mxu0 0.0
        %338 = vmatpush1.msra.mxu0 %v245
        %339 = vmatprep.subr.mxu0 0.0
        %340 = vmatpush1.msra.mxu0 %v246
        %341 = vmatprep.subr.mxu0 0.0
        %342 = vmatpush1.msra.mxu0 %v247
        %343 = vmatprep.subr.mxu0 0.0
        %344 = vmatpush1.msra.mxu0 %v248
        %345 = vmatprep.subr.mxu0 0.0
        %346 = vmatpush1.msra.mxu0 %v249
        %347 = vmatprep.subr.mxu0 0.0
        %348 = vmatpush1.msra.mxu0 %v250
        %349 = vmatprep.subr.mxu0 0.0
        %350 = vmatpush1.msra.mxu0 %v251
        %351 = vmatprep.subr.mxu0 0.0
        %352 = vmatpush1.msra.mxu0 %v252
        %353 = vmatprep.subr.mxu0 0.0
        %354 = vmatpush1.msra.mxu0 %v253
        %355 = vmatprep.subr.mxu0 0.0
        %356 = vmatpush1.msra.mxu0 %v254
        %357 = vmatprep.mubr.f32.mxu0 %v220
        %358 = vmatmul.mubr.f32.gmra.mrb[0].mxu0 %v219
        %v359 = vpop.f32.mrb[0].mxu0
        %v360 = vadd.f32 %v291, %v359
        %v361 = vpop.f32.mrb[0].mxu0
        %362 = vdwg.mxu0
        %363 = vmatprep.subr.mxu0 0.0
        %364 = vmatpush1.msra.mxu0 %v255
        %365 = vmatprep.subr.mxu0 0.0
        %366 = vmatpush1.msra.mxu0 %v256
        %367 = vmatprep.subr.mxu0 0.0
        %368 = vmatpush1.msra.mxu0 %v257
        %369 = vmatprep.subr.mxu0 0.0
        %370 = vmatpush1.msra.mxu0 %v258
        %371 = vmatprep.subr.mxu0 0.0
        %372 = vmatpush1.msra.mxu0 %v259
        %373 = vmatprep.subr.mxu0 0.0
        %374 = vmatpush1.msra.mxu0 %v260
        %375 = vmatprep.subr.mxu0 0.0
        %376 = vmatpush1.msra.mxu0 %v261
        %377 = vmatprep.subr.mxu0 0.0
        %378 = vmatpush1.msra.mxu0 %v262
        %379 = vmatprep.subr.mxu0 0.0
        %380 = vmatpush1.msra.mxu0 %v263
        %381 = vmatprep.subr.mxu0 0.0
        %382 = vmatpush1.msra.mxu0 %v264
        %383 = vmatprep.subr.mxu0 0.0
        %384 = vmatpush1.msra.mxu0 %v265
        %385 = vmatprep.subr.mxu0 0.0
        %386 = vmatpush1.msra.mxu0 %v266
        %387 = vmatprep.subr.mxu0 0.0
        %388 = vmatpush1.msra.mxu0 %v267
        %389 = vmatprep.subr.mxu0 0.0
        %390 = vmatpush1.msra.mxu0 %v268
        %391 = vmatprep.subr.mxu0 0.0
        %392 = vmatpush1.msra.mxu0 %v269
        %393 = vmatprep.subr.mxu0 0.0
        %394 = vmatpush1.msra.mxu0 %v270
        %395 = vmatprep.subr.mxu0 0.0
        %396 = vmatpush1.msra.mxu0 %v271
        %397 = vmatprep.subr.mxu0 0.0
        %398 = vmatpush1.msra.mxu0 %v272
        %399 = vmatprep.subr.mxu0 0.0
        %400 = vmatpush1.msra.mxu0 %v273
        %401 = vmatprep.subr.mxu0 0.0
        %402 = vmatpush1.msra.mxu0 %v274
        %403 = vmatprep.subr.mxu0 0.0
        %404 = vmatpush1.msra.mxu0 %v275
        %405 = vmatprep.subr.mxu0 0.0
        %406 = vmatpush1.msra.mxu0 %v276
        %407 = vmatprep.subr.mxu0 0.0
        %408 = vmatpush1.msra.mxu0 %v277
        %409 = vmatprep.subr.mxu0 0.0
        %410 = vmatpush1.msra.mxu0 %v278
        %411 = vmatprep.subr.mxu0 0.0
        %412 = vmatpush1.msra.mxu0 %v279
        %413 = vmatprep.subr.mxu0 0.0
        %414 = vmatpush1.msra.mxu0 %v280
        %415 = vmatprep.subr.mxu0 0.0
        %416 = vmatpush1.msra.mxu0 %v281
        %417 = vmatprep.subr.mxu0 0.0
        %418 = vmatpush1.msra.mxu0 %v282
        %419 = vmatprep.subr.mxu0 0.0
        %420 = vmatpush1.msra.mxu0 %v283
        %421 = vmatprep.subr.mxu0 0.0
        %422 = vmatpush1.msra.mxu0 %v284
        %423 = vmatprep.subr.mxu0 0.0
        %424 = vmatpush1.msra.mxu0 %v285
        %425 = vmatprep.subr.mxu0 0.0
        %426 = vmatpush1.msra.mxu0 %v286
        %427 = vmatprep.mubr.f32.mxu0 %v222
        %428 = vmatmul.mubr.f32.gmra.mrb[0].mxu0 %v221
        %v429 = vpop.f32.mrb[0].mxu0
        %v430 = vadd.f32 %v360, %v429
        %v431 = vpop.f32.mrb[0].mxu0
        %432 = vdwg.mxu0
        %433 = vst [vmem:[%s218] sm:$0xf] %v430
        %s434 = sand.u32 %s113, 1
        %s435 = scalar_lea.sflag [#allocation4], %s434
        %s436 = sand.u32 %s113, 1
        %s437 = smul.addr %s436, 4
        %s438 = scalar_lea.vmem [#allocation7], %s437
        // Predicated region
        $region41: #{tpu_custom_call.1} parent=31 // pred_check
          %p439 = pneg %p123
        $region42: #{tpu_custom_call.1} parent=31 // pred_check_branch
          %441 = sbr.rel (%p439) target = $region44
        $region43: #{tpu_custom_call.1} parent=31 // pred_region
          %s443 = ssub.s32 64, 64
          %444 = vsyncadd %s435, %s443
          %s445 = smul.addr %s25, 2
          %s446 = sadd.s32 %s26, %s445
          %s447 = smul.addr %s446, 64
          %s448 = scalar_lea.hbm %s3, %s447
          %s450 = sshll.u32 %s438, 4
          %s451 = int_to_ptr.vmem [resolvable:$true] %s450
          %453 = dma.vmem_to_hbm [thread:$0]  %s451, 64, %s448, %s435
        $region44: #{tpu_custom_call.1} parent=31 // pred_fallthru
          _
      $region32: #{tpu_custom_call.1} parent=5 // pred_fallthru
        _
      %p454 = scmp.le.s32.totalorder 2, %s16
      // Predicated region
      $region45: #{tpu_custom_call.1} parent=5 // pred_check
        %p455 = pneg %p454
      $region46: #{tpu_custom_call.1} parent=5 // pred_check_branch
        %457 = sbr.rel (%p455) target = $region48
      $region47: #{tpu_custom_call.1} parent=5 // pred_region
        %s458 = ssub.s32 %s16, 2
        // Predicated region
        $region49: #{tpu_custom_call.1} parent=47 // pred_check
          %p459 = pneg %p129
        $region50: #{tpu_custom_call.1} parent=47 // pred_check_branch
          %461 = sbr.rel (%p459) target = $region52
        $region51: #{tpu_custom_call.1} parent=47 // pred_region
          %s462 = sand.u32 %s114, 1
          %s463 = scalar_lea.sflag [#allocation4], %s462
          %s464 = sand.u32 %s114, 1
          %s465 = smul.addr %s464, 4
          %s466 = scalar_lea.vmem [#allocation7], %s465
          %467 = dma.done %s463, 64
        $region52: #{tpu_custom_call.1} parent=47 // pred_fallthru
          _
      $region48: #{tpu_custom_call.1} parent=5 // pred_fallthru
        _
    $region6: #{tpu_custom_call.1} parent=1 // loop_footer
      %s20 = sadd.s32 1, %s16
    $region7: #{tpu_custom_call.1} parent=1 // loop_footer_branch
      %15 = sbr.rel target = $region3
    $region8: #{tpu_custom_call.1} parent=1 // loop_exit
      _
    %468 = vsyncpa [#allocation3], 1
    %s469 = scalar_lea.sflag [#allocation3], 1
    %470 = vsyncpa %s469, 1
    %471 = vsyncpa [#allocation6], 1
    %472 = vsyncpa [#allocation4], 1
    %s473 = scalar_lea.sflag [#allocation4], 1
    %474 = vsyncpa %s473, 1

</llo_original>
